<compile_context>
chip_gen: v7x
topology: tpu7x:2x2x1
jax: 0.10.0
libtpu: 0.0.40
codegen_flags: <defaults>
</compile_context>

<pallas_src>
import jax
import jax.numpy as jnp
from jax.experimental import pallas as pl
from jax.experimental.pallas import tpu as pltpu


def generate_filter(start, end, size):
    # Identical semantics to the PyTorch helper (band-pass mask on i+j).
    return [[0.0 if (i + j > end or i + j < start) else 1.0 for j in range(size)]
            for i in range(size)]


def _round_up(n, m):
    return ((n + m - 1) // m) * m


def _filter_kernel(x_ref, filt_ref, o_ref):
    # x_ref:    (tile_g, 8, D)  row-groups of x, spatial dims flattened to lanes
    # filt_ref: (1, 8, D)       shared pre-broadcast filter slab
    # o_ref:    (tile_g, 8, D)
    o_ref[...] = (x_ref[...] * filt_ref[...]).astype(o_ref.dtype)


def filter_forward(x, base, learnable, *, use_learnable=True, norm=False,
                   ft_num=None,
                   vmem_tile_budget_bytes=32 * 1024 * 1024):
    """Pallas implementation of Filter.forward.

    x: [B, C, S, S] (NCHW)
    base, learnable: [S, S]
    """
    B, C, S1, S2 = x.shape
    assert S1 == S2 and base.shape == (S1, S2)
    S = S1
    N = B * C
    D = S * S
    # TODO(synk): when S*S is not a multiple of 128, the row tails produce
    # lane-masked stores; a fully-flattened 128*k-lane layout would fix this
    # but needs a replicated filter slab of width lcm(D, 128).

    # ---- Hoisted filter construction (runs once, tiny [S, S] op) ----
    filt = base.astype(jnp.float32)
    if use_learnable:
        # norm_sigma(x) = 2*sigmoid(x) - 1
        filt = filt + (2.0 * jax.nn.sigmoid(learnable.astype(jnp.float32)) - 1.0)
    if norm:
        filt = filt / jnp.asarray(ft_num, dtype=jnp.float32)
    # Pre-broadcast to a full (8, D) vreg tile and match x's dtype so the
    # kernel does a single aligned VPU multiply per vreg.
    filt_slab = jnp.broadcast_to(filt.reshape(1, D), (8, D)).reshape(1, 8, D)
    filt_slab = filt_slab.astype(x.dtype)

    # ---- Lane-dense layout: (row-groups, 8, S*S) ----
    x_flat = x.reshape(N, D)
    n_rows = _round_up(N, 8)
    needs_row_pad = n_rows != N
    if needs_row_pad:
        # Rare case (B*C not a multiple of 8): pad at most 7 rows.
        x_flat = jnp.pad(x_flat, ((0, n_rows - N), (0, 0)))
    G = n_rows // 8
    x_g = x_flat.reshape(G, 8, D)  # free reshape (row groups of 8)

    # ---- Tile sizing (row-groups per step) ----
    itemsize = jnp.dtype(x.dtype).itemsize
    bytes_per_group = 8 * D * itemsize
    # in tile + out tile, each double-buffered ≈ 4 live tiles.
    groups_by_vmem = max(1, vmem_tile_budget_bytes // (4 * bytes_per_group))
    # Keep >= 2 grid steps whenever G >= 2 so both v7x TensorCores get work.
    groups_half = max(1, (G + 1) // 2)
    tile_g = int(max(1, min(groups_by_vmem, groups_half)))

    grid = (pl.cdiv(G, tile_g),)

    cost = pl.CostEstimate(
        flops=N * D,                                   # one multiply / element
        transcendentals=0,
        bytes_accessed=2 * N * D * itemsize + 8 * D * itemsize,
    )

    out_g = pl.pallas_call(
        _filter_kernel,
        out_shape=jax.ShapeDtypeStruct((G, 8, D), x.dtype),
        grid=grid,
        in_specs=[
            pl.BlockSpec((tile_g, 8, D), lambda i: (i, 0, 0)),   # x row-groups
            pl.BlockSpec((1, 8, D), lambda i: (0, 0, 0)),        # shared filter
        ],
        out_specs=pl.BlockSpec((tile_g, 8, D), lambda i: (i, 0, 0)),
        compiler_params=pltpu.CompilerParams(
            dimension_semantics=("parallel",),
            vmem_limit_bytes=48 * 1024 * 1024,
        ),
        cost_estimate=cost,
    )(x_g, filt_slab)

    out_flat = out_g.reshape(n_rows, D)
    if needs_row_pad:
        out_flat = out_flat[:N]
    return out_flat.reshape(B, C, S, S)


def _reference(x, base, learnable, *, use_learnable, norm, ft_num):
    filt = base + (2.0 * jax.nn.sigmoid(learnable) - 1.0) if use_learnable else base
    y = x * filt
    if norm:
        y = y / ft_num
    return y


if __name__ == "__main__":
    key = jax.random.PRNGKey(0)
    B, C, S = 2, 4, 16
    band_start, band_end = 0, S // 2  # e.g. low-frequency band

    k_x, k_learn = jax.random.split(key)
    x = jax.random.normal(k_x, (B, C, S, S), dtype=jnp.float32)

    # Deterministic parameter init matching the module's __init__ shapes.
    base = jnp.asarray(generate_filter(band_start, band_end, S), dtype=jnp.float32)
    learnable = 0.1 * jax.random.normal(k_learn, (S, S), dtype=jnp.float32)
    ft_num = float(jnp.sum(base))

    use_learnable = True

    # norm=False path
    y = filter_forward(x, base, learnable, use_learnable=use_learnable,
                       norm=False, ft_num=ft_num)
    y = jax.block_until_ready(y)
    y_ref = _reference(x, base, learnable, use_learnable=use_learnable,
                       norm=False, ft_num=ft_num)
    assert y.shape == (B, C, S, S)
    assert jnp.allclose(y, y_ref, atol=1e-5, rtol=1e-5), "mismatch vs reference"

    # norm=True path
    y2 = filter_forward(x, base, learnable, use_learnable=use_learnable,
                        norm=True, ft_num=ft_num)
    y2 = jax.block_until_ready(y2)
    y2_ref = _reference(x, base, learnable, use_learnable=use_learnable,
                        norm=True, ft_num=ft_num)
    assert jnp.allclose(y2, y2_ref, atol=1e-5, rtol=1e-5), "norm mismatch"

    # use_learnable=False path
    y3 = filter_forward(x, base, learnable, use_learnable=False,
                        norm=False, ft_num=ft_num)
    y3 = jax.block_until_ready(y3)
    y3_ref = _reference(x, base, learnable, use_learnable=False,
                        norm=False, ft_num=ft_num)
    assert jnp.allclose(y3, y3_ref, atol=1e-5, rtol=1e-5), "no-learnable mismatch"

    print("KERNEL_OK")
</pallas_src>

<mosaic_0001>
module attributes {stable_mosaic.version = 11 : i64} {
  func.func @_filter_kernel(%arg0: i32, %arg1: memref<1x8x256xf32, #tpu.memory_space<vmem>>, %arg2: memref<1x8x256xf32, #tpu.memory_space<vmem>>, %arg3: memref<1x8x256xf32, #tpu.memory_space<vmem>>) attributes {dimension_semantics = [#tpu.dimension_semantics<parallel>], iteration_bounds = array<i64: 1>, scalar_prefetch = 0 : i64, scratch_operands = 0 : i64, tpu.core_type = #tpu.core_type<tc>, window_params = [{transform_indices = @transform_0, window_bounds = array<i64: 1, 8, 256>}, {pipeline_mode = #tpu.pipeline_mode<synchronous>, transform_indices = @transform_1, window_bounds = array<i64: 1, 8, 256>}, {transform_indices = @transform_2, window_bounds = array<i64: 1, 8, 256>}]} {
    %c0 = arith.constant 0 : index
    %c0_0 = arith.constant 0 : index
    %c0_1 = arith.constant 0 : index
    %0 = vector.load %arg1[%c0, %c0_0, %c0_1] : memref<1x8x256xf32, #tpu.memory_space<vmem>>, vector<1x8x256xf32>
    %c0_2 = arith.constant 0 : index
    %c0_3 = arith.constant 0 : index
    %c0_4 = arith.constant 0 : index
    %1 = vector.load %arg2[%c0_2, %c0_3, %c0_4] : memref<1x8x256xf32, #tpu.memory_space<vmem>>, vector<1x8x256xf32>
    %2 = arith.mulf %0, %1 : vector<1x8x256xf32>
    %c0_5 = arith.constant 0 : index
    %c0_6 = arith.constant 0 : index
    %c0_7 = arith.constant 0 : index
    %3 = vector.load %arg3[%c0_5, %c0_6, %c0_7] : memref<1x8x256xf32, #tpu.memory_space<vmem>>, vector<1x8x256xf32>
    tpu.vector_store %arg3[%c0_5, %c0_6, %c0_7], %2 {strides = array<i32>} : memref<1x8x256xf32, #tpu.memory_space<vmem>>, vector<1x8x256xf32>,
    return
  }
  func.func @transform_0(%arg0: i32) -> (i32, i32, i32) {
    %c0_i32 = arith.constant 0 : i32
    %c0_i32_0 = arith.constant 0 : i32
    %c0_i32_1 = arith.constant 0 : i32
    return %arg0, %c0_i32, %c0_i32_0 : i32, i32, i32
  }
  func.func @transform_1(%arg0: i32) -> (i32, i32, i32) {
    %c0_i32 = arith.constant 0 : i32
    %c0_i32_0 = arith.constant 0 : i32
    %c0_i32_1 = arith.constant 0 : i32
    %c0_i32_2 = arith.constant 0 : i32
    return %c0_i32, %c0_i32_0, %c0_i32_1 : i32, i32, i32
  }
  func.func @transform_2(%arg0: i32) -> (i32, i32, i32) {
    %c0_i32 = arith.constant 0 : i32
    %c0_i32_0 = arith.constant 0 : i32
    %c0_i32_1 = arith.constant 0 : i32
    return %arg0, %c0_i32, %c0_i32_0 : i32, i32, i32
  }
}

</mosaic_0001>

<llo_original>
// kernel: tpu_custom_call.1
$region0: #{tpu_custom_call.1}
  #allocation0 [shape = 'u32[]', space=smem, size = 0x4, offset = 0x4, fixed_abs, tag = 'smem constant byte address 0x4 - core index']
  #allocation1 [shape = 'u32[144,128]{1,0:T(1,128)}', space=vmem, size = 0x12000, scoped, tag = 'internal scratch']
  %s0 = inlined_call_operand.hbm [shape: f32[1,8,256], index: 0, kind: input, shape index: {}]
  %s1 = inlined_call_operand.hbm [shape: f32[1,8,256], index: 1, kind: input, shape index: {}]
  %s2 = inlined_call_operand.hbm [shape: f32[1,8,256], index: 2, kind: output, shape index: {}]
  %s3 = sld [smem:[#allocation0]]
  $region26: #{tpu_custom_call.1} parent=0
    _
  %s5 = ssub.s32 1, %s3
  %s6 = scalar_select 0, %s5, %s3
  $region1: #{tpu_custom_call.1} parent=0
    #allocation2 [shape = 'u8[8192]{0}', space=vmem, size = 0x2000, scoped, tag = 'input window, operand 0, single buffered']
    #allocation3 [shape = 's32[1]{0}', space=sflag, size = 0x4, scoped, tag = 'scoped memory for tpu_custom_call.1']
    #allocation4 [shape = 's32[1]{0}', space=sflag, size = 0x4, scoped, tag = 'scoped memory for tpu_custom_call.1']
    #allocation5 [shape = 'u8[8192]{0}', space=vmem, size = 0x2000, scoped, tag = 'input window, operand 1, single buffered']
    #allocation6 [shape = 's32[1]{0}', space=sflag, size = 0x4, scoped, tag = 'scoped memory for tpu_custom_call.1']
    #allocation7 [shape = 'u8[8192]{0}', space=vmem, size = 0x2000, scoped, tag = 'output window, operand 0, single buffered']
    %7 = vsyncpa [#allocation3], 0
    %8 = vsyncpa [#allocation6], 0
    %9 = vsyncpa [#allocation4], 0
    // Predicated region
    $region2: #{tpu_custom_call.1} parent=1 // pred_check
      _
    $region3: #{tpu_custom_call.1} parent=1 // pred_check_branch
      %11 = sbr.rel (0) target = $region5
    $region4: #{tpu_custom_call.1} parent=1 // pred_region
      %s13 = ssub.s32 256, 256
      %14 = vsyncadd [#allocation3], %s13
      %s16 = sshll.u32 [#allocation2], 4
      %s17 = int_to_ptr.vmem [resolvable:$true] %s16
      %19 = dma.hbm_to_vmem [thread:$0]  %s0, 256, %s17, [#allocation3]
    $region5: #{tpu_custom_call.1} parent=1 // pred_fallthru
      _
    // Predicated region
    $region6: #{tpu_custom_call.1} parent=1 // pred_check
      _
    $region7: #{tpu_custom_call.1} parent=1 // pred_check_branch
      %21 = sbr.rel (0) target = $region9
    $region8: #{tpu_custom_call.1} parent=1 // pred_region
      %s23 = ssub.s32 256, 256
      %24 = vsyncadd [#allocation6], %s23
      %s26 = sshll.u32 [#allocation5], 4
      %s27 = int_to_ptr.vmem [resolvable:$true] %s26
      %29 = dma.hbm_to_vmem [thread:$0]  %s1, 256, %s27, [#allocation6]
    $region9: #{tpu_custom_call.1} parent=1 // pred_fallthru
      _
    // Predicated region
    $region10: #{tpu_custom_call.1} parent=1 // pred_check
      _
    $region11: #{tpu_custom_call.1} parent=1 // pred_check_branch
      %31 = sbr.rel (0) target = $region13
    $region12: #{tpu_custom_call.1} parent=1 // pred_region
      %32 = dma.done [#allocation3], 256
    $region13: #{tpu_custom_call.1} parent=1 // pred_fallthru
      _
    // Predicated region
    $region14: #{tpu_custom_call.1} parent=1 // pred_check
      _
    $region15: #{tpu_custom_call.1} parent=1 // pred_check_branch
      %34 = sbr.rel (0) target = $region17
    $region16: #{tpu_custom_call.1} parent=1 // pred_region
      %35 = dma.done [#allocation6], 256
    $region17: #{tpu_custom_call.1} parent=1 // pred_fallthru
      _
    %v36 = vld [vmem:[#allocation2] sm:$0xff]
    %v37 = vld [vmem:[#allocation2 + $0x8] sm:$0xff]
    %v38 = vld [vmem:[#allocation5] sm:$0xff]
    %v39 = vld [vmem:[#allocation5 + $0x8] sm:$0xff]
    %v40 = vmul.f32 %v36, %v38
    %v41 = vmul.f32 %v37, %v39
    %42 = vst [vmem:[#allocation7] sm:$0xff] %v40
    %43 = vst [vmem:[#allocation7 + $0x8] sm:$0xff] %v41
    // Predicated region
    $region18: #{tpu_custom_call.1} parent=1 // pred_check
      _
    $region19: #{tpu_custom_call.1} parent=1 // pred_check_branch
      %45 = sbr.rel (0) target = $region21
    $region20: #{tpu_custom_call.1} parent=1 // pred_region
      %s47 = ssub.s32 256, 256
      %48 = vsyncadd [#allocation4], %s47
      %s50 = sshll.u32 [#allocation7], 4
      %s51 = int_to_ptr.vmem [resolvable:$true] %s50
      %53 = dma.vmem_to_hbm [thread:$0]  %s51, 256, %s2, [#allocation4]
    $region21: #{tpu_custom_call.1} parent=1 // pred_fallthru
      _
    // Predicated region
    $region22: #{tpu_custom_call.1} parent=1 // pred_check
      _
    $region23: #{tpu_custom_call.1} parent=1 // pred_check_branch
      %55 = sbr.rel (0) target = $region25
    $region24: #{tpu_custom_call.1} parent=1 // pred_region
      %56 = dma.done [#allocation4], 256
    $region25: #{tpu_custom_call.1} parent=1 // pred_fallthru
      _
    %57 = vsyncpa [#allocation3], 1
    %58 = vsyncpa [#allocation6], 1
    %59 = vsyncpa [#allocation4], 1

</llo_original>
